<compile_context>
chip_gen: v7x
topology: tpu7x:2x2x1
jax: 0.10.0
libtpu: 0.0.40
codegen_flags: <defaults>
</compile_context>

<pallas_src>
import functools

import jax
import jax.numpy as jnp
from jax.experimental import pallas as pl
from jax.experimental.pallas import tpu as pltpu


def _make_attn_kernel(use_mxu: bool):
    def attn_kernel(x_ref, w_ref, o_ref):
        # x_ref: (TB, S, H) VMEM block of hidden_state
        # w_ref: (1, H)     VMEM, resident across the whole grid
        # o_ref: (TB, S)    VMEM output block (softmax over the last axis == dim=1)
        x = x_ref[...].astype(jnp.float32)          # (TB, S, H)
        w = w_ref[...].astype(jnp.float32)          # (1, H)

        if use_mxu:
            # Large H: push the H-contraction onto the MXU.
            tb, s, h = x.shape
            x2d = x.reshape(tb * s, h)
            score = jnp.dot(x2d, w.T,
                            preferred_element_type=jnp.float32).reshape(tb, s)
        else:
            # Small H (e.g. 32): VPU multiply + XLU lane-reduce is fine and the
            # N=1 output would underuse the MXU anyway.
            score = jnp.sum(x * w[None, :, :], axis=-1)        # (TB, S)

        # Bias intentionally omitted: a uniform shift cancels in softmax.

        # Numerically stable softmax over the sequence axis.
        m = jnp.max(score, axis=-1, keepdims=True)             # (TB, 1)
        e = jnp.exp(score - m)                                  # (TB, S)
        denom = jnp.sum(e, axis=-1, keepdims=True)              # (TB, 1)
        inv = pl.reciprocal(denom, approx=True)                 # EUP vrcp, ~free
        o_ref[...] = (e * inv).astype(o_ref.dtype)

    return attn_kernel


def attn_forward(hidden_state, weight, bias=None, *, block_b=None):
    """hidden_state: (B, S, H); weight: (1, H); bias: (1,) (unused: cancels in softmax)."""
    del bias  # softmax(score + b) == softmax(score); kept in signature for parity.
    B, S, H = hidden_state.shape
    itemsize = jnp.dtype(hidden_state.dtype).itemsize

    if block_b is None:
        # Keep one input buffer <= ~8 MiB so the double-buffered pipeline stays
        # well under the smallest default scoped-VMEM limit (v5e: 16 MiB),
        # and comfortably inside v7x's 64 MiB physical VMEM.
        per_buffer_budget = 8 * 1024 * 1024
        block_b = max(1, min(B, per_buffer_budget // max(1, S * H * itemsize)))
        if block_b < B:
            # Keep the (sublane) batch-tile a multiple of 8 when we actually tile.
            block_b = max(8, (block_b // 8) * 8)

    grid = (pl.cdiv(B, block_b),)
    kernel = _make_attn_kernel(use_mxu=(H >= 256))

    # TODO(synk): for very long S where even a TB=1 block exceeds VMEM, add a
    # second "arbitrary" grid axis over S with an online-softmax accumulator.
    return pl.pallas_call(
        kernel,
        out_shape=jax.ShapeDtypeStruct((B, S), hidden_state.dtype),
        grid_spec=pltpu.PrefetchScalarGridSpec(
            num_scalar_prefetch=0,
            grid=grid,
            in_specs=[
                pl.BlockSpec((block_b, S, H), lambda i: (i, 0, 0)),   # x tile
                pl.BlockSpec((1, H), lambda i: (0, 0)),               # weight (resident)
            ],
            out_specs=pl.BlockSpec((block_b, S), lambda i: (i, 0)),
        ),
        compiler_params=pltpu.CompilerParams(
            dimension_semantics=("parallel",),   # megacore-shardable on v7x
        ),
    )(hidden_state, weight)


if __name__ == "__main__":
    # Small shapes consistent with the module: (batch=2, seq=8, hidden=32)
    B, S, H = 2, 8, 32
    key = jax.random.PRNGKey(0)
    kx, kw, kb = jax.random.split(key, 3)

    hidden_state = jax.random.normal(kx, (B, S, H), dtype=jnp.float32)

    # Deterministic parameter init (same uniform range as torch.nn.Linear).
    bound = 1.0 / jnp.sqrt(jnp.float32(H))
    weight = jax.random.uniform(kw, (1, H), jnp.float32, -bound, bound)
    bias = jax.random.uniform(kb, (1,), jnp.float32, -bound, bound)

    out = attn_forward(hidden_state, weight, bias)
    out = jax.block_until_ready(out)

    # Pure-JAX reference (bias included — it cancels in softmax, so results match).
    score_ref = jnp.einsum("bsh,oh->bso", hidden_state, weight)[:, :, 0] + bias[0]
    ref = jax.nn.softmax(score_ref, axis=1)

    assert out.shape == (B, S)
    # Looser tolerance only because of the approx (EUP) reciprocal in the kernel.
    assert jnp.allclose(out, ref, atol=5e-3, rtol=5e-3)
    assert jnp.allclose(jnp.sum(out, axis=1), jnp.ones((B,)), atol=5e-2)

    print("KERNEL_OK")
</pallas_src>

<mosaic_0001>
module attributes {stable_mosaic.version = 11 : i64} {
  func.func @attn_kernel(%arg0: i32, %arg1: memref<2x8x32xf32, #tpu.memory_space<vmem>>, %arg2: memref<1x32xf32, #tpu.memory_space<vmem>>, %arg3: memref<2x8xf32, #tpu.memory_space<vmem>>) attributes {dimension_semantics = [#tpu.dimension_semantics<parallel>], iteration_bounds = array<i64: 1>, scalar_prefetch = 0 : i64, scratch_operands = 0 : i64, tpu.core_type = #tpu.core_type<tc>, window_params = [{transform_indices = @transform_0, window_bounds = array<i64: 2, 8, 32>}, {pipeline_mode = #tpu.pipeline_mode<synchronous>, transform_indices = @transform_1, window_bounds = array<i64: 1, 32>}, {transform_indices = @transform_2, window_bounds = array<i64: 2, 8>}]} {
    %c0 = arith.constant 0 : index
    %c0_0 = arith.constant 0 : index
    %c0_1 = arith.constant 0 : index
    %0 = vector.load %arg1[%c0, %c0_0, %c0_1] : memref<2x8x32xf32, #tpu.memory_space<vmem>>, vector<2x8x32xf32>
    %c0_2 = arith.constant 0 : index
    %c0_3 = arith.constant 0 : index
    %1 = vector.load %arg2[%c0_2, %c0_3] : memref<1x32xf32, #tpu.memory_space<vmem>>, vector<1x32xf32>
    %2 = vector.shape_cast %1 : vector<1x32xf32> to vector<1x1x32xf32>
    %3 = vector.broadcast %2 : vector<1x1x32xf32> to vector<2x8x32xf32>
    %4 = arith.mulf %0, %3 : vector<2x8x32xf32>
    %cst = arith.constant dense<0.000000e+00> : vector<2x8xf32>
    %5 = vector.multi_reduction <add>, %4, %cst [2] : vector<2x8x32xf32> to vector<2x8xf32>
    %cst_4 = arith.constant dense<0xFF800000> : vector<2xf32>
    %6 = vector.multi_reduction <maximumf>, %5, %cst_4 [1] : vector<2x8xf32> to vector<2xf32>
    %7 = vector.shape_cast %6 : vector<2xf32> to vector<2x1xf32>
    %8 = vector.broadcast %7 : vector<2x1xf32> to vector<2x8xf32>
    %9 = arith.subf %5, %8 : vector<2x8xf32>
    %10 = math.exp %9 : vector<2x8xf32>
    %cst_5 = arith.constant dense<0.000000e+00> : vector<2xf32>
    %11 = vector.multi_reduction <add>, %10, %cst_5 [1] : vector<2x8xf32> to vector<2xf32>
    %12 = vector.shape_cast %11 : vector<2xf32> to vector<2x1xf32>
    %13 = tpu.reciprocal %12 {approx = true} : vector<2x1xf32> -> vector<2x1xf32>
    %14 = vector.broadcast %13 : vector<2x1xf32> to vector<2x8xf32>
    %15 = arith.mulf %10, %14 : vector<2x8xf32>
    %c0_6 = arith.constant 0 : index
    %c0_7 = arith.constant 0 : index
    %16 = vector.load %arg3[%c0_6, %c0_7] : memref<2x8xf32, #tpu.memory_space<vmem>>, vector<2x8xf32>
    tpu.vector_store %arg3[%c0_6, %c0_7], %15 {strides = array<i32>} : memref<2x8xf32, #tpu.memory_space<vmem>>, vector<2x8xf32>,
    return
  }
  func.func @transform_0(%arg0: i32) -> (i32, i32, i32) {
    %c0_i32 = arith.constant 0 : i32
    %c0_i32_0 = arith.constant 0 : i32
    %c0_i32_1 = arith.constant 0 : i32
    return %arg0, %c0_i32, %c0_i32_0 : i32, i32, i32
  }
  func.func @transform_1(%arg0: i32) -> (i32, i32) {
    %c0_i32 = arith.constant 0 : i32
    %c0_i32_0 = arith.constant 0 : i32
    %c0_i32_1 = arith.constant 0 : i32
    return %c0_i32, %c0_i32_0 : i32, i32
  }
  func.func @transform_2(%arg0: i32) -> (i32, i32) {
    %c0_i32 = arith.constant 0 : i32
    %c0_i32_0 = arith.constant 0 : i32
    return %arg0, %c0_i32 : i32, i32
  }
}

</mosaic_0001>

<llo_original>
// kernel: tpu_custom_call.1
$region0: #{tpu_custom_call.1}
  #allocation0 [shape = 'u32[]', space=smem, size = 0x4, offset = 0x4, fixed_abs, tag = 'smem constant byte address 0x4 - core index']
  #allocation1 [shape = 'u32[144,128]{1,0:T(1,128)}', space=vmem, size = 0x12000, scoped, tag = 'internal scratch']
  %s0 = inlined_call_operand.hbm [shape: f32[2,8,32], index: 0, kind: input, shape index: {}]
  %s1 = inlined_call_operand.vmem [shape: f32[1,32], index: 1, kind: input, shape index: {}]
  %s2 = inlined_call_operand.hbm [shape: f32[2,8], index: 2, kind: output, shape index: {}]
  %s3 = sld [smem:[#allocation0]]
  $region22: #{tpu_custom_call.1} parent=0
    _
  %s5 = ssub.s32 1, %s3
  %s6 = scalar_select 0, %s5, %s3
  $region1: #{tpu_custom_call.1} parent=0
    #allocation2 [shape = 'u8[8192]{0}', space=vmem, size = 0x2000, scoped, tag = 'input window, operand 0, single buffered']
    #allocation3 [shape = 's32[1]{0}', space=sflag, size = 0x4, scoped, tag = 'scoped memory for tpu_custom_call.1']
    #allocation4 [shape = 's32[1]{0}', space=sflag, size = 0x4, scoped, tag = 'scoped memory for tpu_custom_call.1']
    #allocation5 [shape = 'u8[1024]{0}', space=vmem, size = 0x400, scoped, tag = 'output window, operand 0, single buffered']
    %7 = vsyncpa [#allocation3], 0
    %8 = vsyncpa [#allocation4], 0
    // Predicated region
    $region2: #{tpu_custom_call.1} parent=1 // pred_check
      _
    $region3: #{tpu_custom_call.1} parent=1 // pred_check_branch
      %10 = sbr.rel (0) target = $region5
    $region4: #{tpu_custom_call.1} parent=1 // pred_region
      %s12 = ssub.s32 256, 256
      %13 = vsyncadd [#allocation3], %s12
      %s14 = sshll.u32 [#allocation2], 4
      %s15 = int_to_ptr.vmem [resolvable:$true] %s14
      %20 = dma.hbm_to_vmem [thread:$0]  %s0, 256, %s15, [#allocation3], 128, 128, 8
    $region5: #{tpu_custom_call.1} parent=1 // pred_fallthru
      _
    // Predicated region
    $region6: #{tpu_custom_call.1} parent=1 // pred_check
      _
    $region7: #{tpu_custom_call.1} parent=1 // pred_check_branch
      %22 = sbr.rel (0) target = $region9
    $region8: #{tpu_custom_call.1} parent=1 // pred_region
      _
    $region9: #{tpu_custom_call.1} parent=1 // pred_fallthru
      _
    // Predicated region
    $region10: #{tpu_custom_call.1} parent=1 // pred_check
      _
    $region11: #{tpu_custom_call.1} parent=1 // pred_check_branch
      %24 = sbr.rel (0) target = $region13
    $region12: #{tpu_custom_call.1} parent=1 // pred_region
      %25 = dma.done [#allocation3], 256
    $region13: #{tpu_custom_call.1} parent=1 // pred_fallthru
      _
    %v26 = vld [vmem:[#allocation2] sm:$0xff]
    %v27 = vld [vmem:[#allocation2 + $0x8] sm:$0xff]
    %v28 = vld [vmem:[%s1] sm:$0x1]
    %v30 = vlaneseq
    %v31 = vshrl.u32 %v30, 7
    %v32 = vsub.s32 0, %v31
    %v33 = vrot.slane %v28, %v32
    %v35 = vmul.f32 %v26, %v33
    %v36 = vmul.f32 %v27, %v33
    %vm37 = vcmask 261120
    %v38 = vsel %vm37, %v35, 0.0
    %39 = vadd.xlane.f32.xlu0 %v38
    %v40 = vpop.xlane.xlu0 %39
    %v41 = vsel %vm37, %v36, 0.0
    %42 = vadd.xlane.f32.xlu0 %v41
    %v43 = vpop.xlane.xlu0 %42
    %v46 = vlaneseq
    %v47 = vand.u32 %v46, 127
    %v48 = vlaneseq
    %v49 = vshrl.u32 %v48, 7
    %v50 = vsub.s32 %v47, %v49
    %v51 = vrot.slane %v40, %v50
    %v52 = vlaneseq
    %v53 = vshrl.u32 %v52, 7
    %v54 = vsub.s32 %v47, %v53
    %v55 = vrot.slane %v43, %v54
    %vm56 = vcmask 1041409
    %v57 = vsel %vm56, %v55, %v51
    %vm59 = vcmask 58368
    %v60 = vsel %vm59, %v57, -inf
    %61 = vmax.xlane.f32.xlu0 %v60
    %v62 = vpop.xlane.xlu0 %61
    %v64 = vlaneseq
    %v65 = vshrl.u32 %v64, 7
    %v66 = vsub.s32 0, %v65
    %v67 = vrot.slane %v62, %v66
    %v68 = vlaneseq
    %v69 = vshrl.u32 %v68, 7
    %v70 = vsub.s32 1, %v69
    %v71 = vrot.slane %v62, %v70
    %v74 = vsub.f32 %v40, %v67
    %v75 = vsub.f32 %v43, %v71
    %v76 = vmul.f32 %v74, 1.442695
    %v77 = vpow.pop %v76
    %v78 = vmul.f32 %v75, 1.442695
    %v79 = vpow.pop %v78
    %82 = vset.pattern.permute.xlu0 0
    %83 = vperm.xlu0 %82, %v77
    %v84 = vpop.permute.xlu0 %83
    %85 = vset.pattern.permute.xlu0 0
    %86 = vperm.xlu0 %85, %v79
    %v87 = vpop.permute.xlu0 %86
    %v88 = vlaneseq
    %v89 = vshrl.u32 %v88, 7
    %v90 = vsub.s32 %v47, %v89
    %v91 = vrot.slane %v84, %v90
    %v92 = vlaneseq
    %v93 = vshrl.u32 %v92, 7
    %v94 = vsub.s32 %v47, %v93
    %v95 = vrot.slane %v87, %v94
    %v96 = vsel %vm56, %v95, %v91
    %v98 = vsel %vm59, %v96, 0.0
    %99 = vadd.xlane.f32.xlu0 %v98
    %v100 = vpop.xlane.xlu0 %99
    %v101 = vrcp.pop %v100
    %v103 = vlaneseq
    %v104 = vshrl.u32 %v103, 7
    %v105 = vsub.s32 0, %v104
    %v106 = vrot.slane %v101, %v105
    %v107 = vlaneseq
    %v108 = vshrl.u32 %v107, 7
    %v109 = vsub.s32 1, %v108
    %v110 = vrot.slane %v101, %v109
    %v113 = vmul.f32 %v77, %v106
    %v114 = vmul.f32 %v79, %v110
    %117 = vset.pattern.permute.xlu0 0
    %118 = vperm.xlu0 %117, %v113
    %v119 = vpop.permute.xlu0 %118
    %120 = vset.pattern.permute.xlu0 0
    %121 = vperm.xlu0 %120, %v114
    %v122 = vpop.permute.xlu0 %121
    %v123 = vlaneseq
    %v124 = vshrl.u32 %v123, 7
    %v125 = vsub.s32 %v47, %v124
    %v126 = vrot.slane %v119, %v125
    %v127 = vlaneseq
    %v128 = vshrl.u32 %v127, 7
    %v129 = vsub.s32 %v47, %v128
    %v130 = vrot.slane %v122, %v129
    %v131 = vsel %vm56, %v130, %v126
    %133 = vst.msk [vmem:[#allocation5] sm:$0x3] %vm59, %v131
    // Predicated region
    $region14: #{tpu_custom_call.1} parent=1 // pred_check
      _
    $region15: #{tpu_custom_call.1} parent=1 // pred_check_branch
      %135 = sbr.rel (0) target = $region17
    $region16: #{tpu_custom_call.1} parent=1 // pred_region
      %s137 = ssub.s32 32, 32
      %138 = vsyncadd [#allocation4], %s137
      %s140 = sshll.u32 [#allocation5], 4
      %s141 = int_to_ptr.vmem [resolvable:$true] %s140
      %143 = dma.vmem_to_hbm [thread:$0]  %s141, 32, %s2, [#allocation4]
    $region17: #{tpu_custom_call.1} parent=1 // pred_fallthru
      _
    // Predicated region
    $region18: #{tpu_custom_call.1} parent=1 // pred_check
      _
    $region19: #{tpu_custom_call.1} parent=1 // pred_check_branch
      %145 = sbr.rel (0) target = $region21
    $region20: #{tpu_custom_call.1} parent=1 // pred_region
      %146 = dma.done [#allocation4], 32
    $region21: #{tpu_custom_call.1} parent=1 // pred_fallthru
      _
    %147 = vsyncpa [#allocation3], 1
    %148 = vsyncpa [#allocation4], 1

</llo_original>
